<compile_context>
chip_gen: v7x
topology: tpu7x:2x2x1
jax: 0.10.0
libtpu: 0.0.40
codegen_flags: <defaults>
</compile_context>

<pallas_src>
import math

import jax
import jax.numpy as jnp
from jax.experimental import pallas as pl
from jax.experimental.pallas import tpu as pltpu


def make_positional_encoding_table(d_model: int, vocab_size: int = 1000,
                                   dtype=jnp.float32) -> jnp.ndarray:
    """Deterministic sinusoidal table, identical to the PyTorch __init__."""
    assert d_model % 2 == 0, "sinusoidal PE table requires an even d_model"
    position = jnp.arange(0, vocab_size, dtype=jnp.float32)[:, None]           # (V, 1)
    div_term = jnp.exp(jnp.arange(0, d_model, 2, dtype=jnp.float32)
                       * (-math.log(10000.0) / d_model))                       # (D/2,)
    angles = position * div_term                                               # (V, D/2)
    pe = jnp.zeros((vocab_size, d_model), dtype=jnp.float32)
    pe = pe.at[:, 0::2].set(jnp.sin(angles))
    pe = pe.at[:, 1::2].set(jnp.cos(angles))
    return pe[None, :, :].astype(dtype)                                        # (1, V, D)


def _add_kernel(x_ref, pe_ref, o_ref):
    # Broadcasted elementwise add; pe block has a leading 1 on the batch axis.
    o_ref[...] = x_ref[...] + pe_ref[...]


def _round_down(x: int, m: int) -> int:
    return (x // m) * m


# ~2 MiB per x tile -> ~10-12 MiB resident with double buffering: fits the
# default scoped-VMEM limit on v5e (16 MiB) and leaves headroom on v6e/v7x
# (64 MiB physical VMEM per TC on v7x).
_TARGET_TILE_BYTES = 2 * 1024 * 1024


def positional_encoding_forward(x: jnp.ndarray, pe: jnp.ndarray) -> jnp.ndarray:
    """x: (B, S, D); pe: (1, V, D) with V >= S. Returns x + pe[:, :S, :]."""
    B, S, D = x.shape
    assert pe.ndim == 3 and pe.shape[0] == 1 and pe.shape[2] == D and pe.shape[1] >= S
    pe = pe.astype(x.dtype)          # keep bf16 end-to-end if activations are bf16
    elt = jnp.dtype(x.dtype).itemsize

    if (S * D) % 128 == 0:
        # Lane-dense path: flatten (S, D) so the last (lane) dim is a multiple of
        # 128 even when D < 128 (avoids masked vst.msk partial stores). The
        # contiguous reshapes are metadata-only, and the FULL pe table is indexed
        # through the BlockSpec -- no wrapper slice / extra HBM copy.
        N = S * D
        x2 = x.reshape(B, N)
        pe2 = pe.reshape(1, pe.shape[1] * D)
        tf = max(128, _round_down(_TARGET_TILE_BYTES // (B * elt), 128))
        tf = min(tf, N)
        out2 = pl.pallas_call(
            _add_kernel,
            out_shape=jax.ShapeDtypeStruct((B, N), x.dtype),
            grid=(pl.cdiv(N, tf),),
            in_specs=[
                pl.BlockSpec((B, tf), lambda t: (0, t)),    # x tile (all batches at once)
                pl.BlockSpec((1, tf), lambda t: (0, t)),    # matching slice of the pe table
            ],
            out_specs=pl.BlockSpec((B, tf), lambda t: (0, t)),
            input_output_aliases={0: 0},                    # x is dead after the add
            compiler_params=pltpu.CompilerParams(
                dimension_semantics=("parallel",)),
        )(x2, pe2)
        return out2.reshape(B, S, D)

    # General 3-D path: tile the sequence axis with (1, TS, D) blocks. Grid is
    # (seq_tiles, batch) with batch innermost so the pe tile's block index stays
    # constant across consecutive steps (fetched once per sequence tile).
    ts = _TARGET_TILE_BYTES // (D * elt)
    if ts >= S:
        ts = S                                   # full-extent block
    else:
        ts = max(8, _round_down(ts, 8))          # respect the (8, 128) sublane rule
    if ts % 8 == 0:
        pe_in = pe                               # index the full table via BlockSpec
    else:
        pe_in = pe[:, :S, :]                     # ts == S and S % 8 != 0: block must equal full dims
    return pl.pallas_call(
        _add_kernel,
        out_shape=jax.ShapeDtypeStruct((B, S, D), x.dtype),
        grid=(pl.cdiv(S, ts), B),
        in_specs=[
            pl.BlockSpec((1, ts, D), lambda s, b: (b, s, 0)),
            pl.BlockSpec((1, ts, D), lambda s, b: (0, s, 0)),
        ],
        out_specs=pl.BlockSpec((1, ts, D), lambda s, b: (b, s, 0)),
        input_output_aliases={0: 0},
        compiler_params=pltpu.CompilerParams(
            dimension_semantics=("parallel", "parallel")),
    )(x, pe_in)


if __name__ == "__main__":
    B, S, D = 2, 8, 32
    vocab_size = 1000

    key = jax.random.PRNGKey(0)
    x = jax.random.normal(key, (B, S, D), dtype=jnp.float32)
    pe = make_positional_encoding_table(D, vocab_size=vocab_size)

    # Reference (pure JAX), computed up front.
    ref = x + pe[:, :S, :]

    out = positional_encoding_forward(x, pe)
    out = jax.block_until_ready(out)

    assert out.shape == (B, S, D)
    assert jnp.allclose(out, ref, atol=1e-6, rtol=1e-6)

    print("KERNEL_OK")
</pallas_src>

<mosaic_0001>
module attributes {stable_mosaic.version = 11 : i64} {
  func.func @_add_kernel(%arg0: i32, %arg1: memref<2x256xf32, #tpu.memory_space<vmem>>, %arg2: memref<1x256xf32, #tpu.memory_space<vmem>>, %arg3: memref<2x256xf32, #tpu.memory_space<vmem>>) attributes {dimension_semantics = [#tpu.dimension_semantics<parallel>], iteration_bounds = array<i64: 1>, scalar_prefetch = 0 : i64, scratch_operands = 0 : i64, tpu.core_type = #tpu.core_type<tc>, window_params = [{transform_indices = @transform_0, window_bounds = array<i64: 2, 256>}, {transform_indices = @transform_1, window_bounds = array<i64: 1, 256>}, {transform_indices = @transform_2, window_bounds = array<i64: 2, 256>}]} {
    %c0 = arith.constant 0 : index
    %c0_0 = arith.constant 0 : index
    %0 = vector.load %arg1[%c0, %c0_0] : memref<2x256xf32, #tpu.memory_space<vmem>>, vector<2x256xf32>
    %c0_1 = arith.constant 0 : index
    %c0_2 = arith.constant 0 : index
    %1 = vector.load %arg2[%c0_1, %c0_2] : memref<1x256xf32, #tpu.memory_space<vmem>>, vector<1x256xf32>
    %2 = vector.broadcast %1 : vector<1x256xf32> to vector<2x256xf32>
    %3 = arith.addf %0, %2 : vector<2x256xf32>
    %c0_3 = arith.constant 0 : index
    %c0_4 = arith.constant 0 : index
    %4 = vector.load %arg3[%c0_3, %c0_4] : memref<2x256xf32, #tpu.memory_space<vmem>>, vector<2x256xf32>
    tpu.vector_store %arg3[%c0_3, %c0_4], %3 {strides = array<i32>} : memref<2x256xf32, #tpu.memory_space<vmem>>, vector<2x256xf32>,
    return
  }
  func.func @transform_0(%arg0: i32) -> (i32, i32) {
    %c0_i32 = arith.constant 0 : i32
    %c0_i32_0 = arith.constant 0 : i32
    return %c0_i32, %arg0 : i32, i32
  }
  func.func @transform_1(%arg0: i32) -> (i32, i32) {
    %c0_i32 = arith.constant 0 : i32
    %c0_i32_0 = arith.constant 0 : i32
    return %c0_i32, %arg0 : i32, i32
  }
  func.func @transform_2(%arg0: i32) -> (i32, i32) {
    %c0_i32 = arith.constant 0 : i32
    %c0_i32_0 = arith.constant 0 : i32
    return %c0_i32, %arg0 : i32, i32
  }
}

</mosaic_0001>

<llo_original>
// kernel: tpu_custom_call.1
$region0: #{tpu_custom_call.1}
  #allocation0 [shape = 'u32[]', space=smem, size = 0x4, offset = 0x4, fixed_abs, tag = 'smem constant byte address 0x4 - core index']
  #allocation1 [shape = 'u32[144,128]{1,0:T(1,128)}', space=vmem, size = 0x12000, scoped, tag = 'internal scratch']
  %s0 = inlined_call_operand.hbm [shape: f32[2,256], index: 0, kind: input, shape index: {}, may-alias: {0,2}]
  %s1 = inlined_call_operand.hbm [shape: f32[1,32000], index: 1, kind: input, shape index: {}]
  %s2 = inlined_call_operand.hbm [shape: f32[2,256], index: 2, kind: output, shape index: {}, may-alias: {0,2}]
  %s3 = sld [smem:[#allocation0]]
  $region26: #{tpu_custom_call.1} parent=0
    _
  %s5 = ssub.s32 1, %s3
  %s6 = scalar_select 0, %s5, %s3
  $region1: #{tpu_custom_call.1} parent=0
    #allocation2 [shape = 'u8[2048]{0}', space=vmem, size = 0x800, scoped, tag = 'input window, operand 0, single buffered']
    #allocation3 [shape = 's32[1]{0}', space=sflag, size = 0x4, scoped, tag = 'scoped memory for tpu_custom_call.1']
    #allocation4 [shape = 's32[1]{0}', space=sflag, size = 0x4, scoped, tag = 'scoped memory for tpu_custom_call.1']
    #allocation5 [shape = 'u8[1024]{0}', space=vmem, size = 0x400, scoped, tag = 'input window, operand 1, single buffered']
    #allocation6 [shape = 's32[1]{0}', space=sflag, size = 0x4, scoped, tag = 'scoped memory for tpu_custom_call.1']
    #allocation7 [shape = 'u8[2048]{0}', space=vmem, size = 0x800, scoped, tag = 'output window, operand 0, single buffered']
    %7 = vsyncpa [#allocation3], 0
    %8 = vsyncpa [#allocation6], 0
    %9 = vsyncpa [#allocation4], 0
    // Predicated region
    $region2: #{tpu_custom_call.1} parent=1 // pred_check
      _
    $region3: #{tpu_custom_call.1} parent=1 // pred_check_branch
      %11 = sbr.rel (0) target = $region5
    $region4: #{tpu_custom_call.1} parent=1 // pred_region
      %s13 = ssub.s32 64, 64
      %14 = vsyncadd [#allocation3], %s13
      %s16 = sshll.u32 [#allocation2], 4
      %s17 = int_to_ptr.vmem [resolvable:$true] %s16
      %19 = dma.hbm_to_vmem [thread:$0]  %s0, 64, %s17, [#allocation3]
    $region5: #{tpu_custom_call.1} parent=1 // pred_fallthru
      _
    // Predicated region
    $region6: #{tpu_custom_call.1} parent=1 // pred_check
      _
    $region7: #{tpu_custom_call.1} parent=1 // pred_check_branch
      %21 = sbr.rel (0) target = $region9
    $region8: #{tpu_custom_call.1} parent=1 // pred_region
      %s23 = ssub.s32 32, 32
      %24 = vsyncadd [#allocation6], %s23
      %s26 = sshll.u32 [#allocation5], 4
      %s27 = int_to_ptr.vmem [resolvable:$true] %s26
      %29 = dma.hbm_to_vmem [thread:$0]  %s1, 32, %s27, [#allocation6]
    $region9: #{tpu_custom_call.1} parent=1 // pred_fallthru
      _
    // Predicated region
    $region10: #{tpu_custom_call.1} parent=1 // pred_check
      _
    $region11: #{tpu_custom_call.1} parent=1 // pred_check_branch
      %31 = sbr.rel (0) target = $region13
    $region12: #{tpu_custom_call.1} parent=1 // pred_region
      %32 = dma.done [#allocation3], 64
    $region13: #{tpu_custom_call.1} parent=1 // pred_fallthru
      _
    // Predicated region
    $region14: #{tpu_custom_call.1} parent=1 // pred_check
      _
    $region15: #{tpu_custom_call.1} parent=1 // pred_check_branch
      %34 = sbr.rel (0) target = $region17
    $region16: #{tpu_custom_call.1} parent=1 // pred_region
      %35 = dma.done [#allocation6], 32
    $region17: #{tpu_custom_call.1} parent=1 // pred_fallthru
      _
    %v36 = vld [vmem:[#allocation2] sm:$0xf]
    %v37 = vld [vmem:[#allocation5] sm:$0x3]
    %v39 = vlaneseq
    %v40 = vshrl.u32 %v39, 7
    %v41 = vsub.s32 0, %v40
    %v42 = vrot.slane %v37, %v41
    %v43 = vlaneseq
    %v44 = vshrl.u32 %v43, 7
    %v45 = vsub.s32 1, %v44
    %v46 = vrot.slane %v37, %v45
    %v47 = vcombine.low %v42, %v46
    %v49 = vunpack.c.l.s4 1983009808
    %v50 = vunpack.c.0.s8 %v49
    %v51 = vlaneseq
    %v52 = vshrl.u32 %v51, 7
    %v53 = vsub.s32 %v50, %v52
    %v54 = vrot.slane %v47, %v53
    %v56 = vadd.f32 %v36, %v54
    %57 = vst [vmem:[#allocation7] sm:$0xf] %v56
    // Predicated region
    $region18: #{tpu_custom_call.1} parent=1 // pred_check
      _
    $region19: #{tpu_custom_call.1} parent=1 // pred_check_branch
      %59 = sbr.rel (0) target = $region21
    $region20: #{tpu_custom_call.1} parent=1 // pred_region
      %s61 = ssub.s32 64, 64
      %62 = vsyncadd [#allocation4], %s61
      %s64 = sshll.u32 [#allocation7], 4
      %s65 = int_to_ptr.vmem [resolvable:$true] %s64
      %67 = dma.vmem_to_hbm [thread:$0]  %s65, 64, %s2, [#allocation4]
    $region21: #{tpu_custom_call.1} parent=1 // pred_fallthru
      _
    // Predicated region
    $region22: #{tpu_custom_call.1} parent=1 // pred_check
      _
    $region23: #{tpu_custom_call.1} parent=1 // pred_check_branch
      %69 = sbr.rel (0) target = $region25
    $region24: #{tpu_custom_call.1} parent=1 // pred_region
      %70 = dma.done [#allocation4], 64
    $region25: #{tpu_custom_call.1} parent=1 // pred_fallthru
      _
    %71 = vsyncpa [#allocation3], 1
    %72 = vsyncpa [#allocation6], 1
    %73 = vsyncpa [#allocation4], 1

</llo_original>
